<compile_context>
chip_gen: v7x
topology: tpu7x:2x2x1
jax: 0.10.0
libtpu: 0.0.40
codegen_flags: <defaults>
</compile_context>

<pallas_src>
import jax
import jax.numpy as jnp
from jax.experimental import pallas as pl
from jax.experimental.pallas import tpu as pltpu


def _round_up(x, m):
    return ((x + m - 1) // m) * m


def _sae_kernel(norm_ref,            # SMEM (1,)   f32 scalar standard_norm
                x_ref,               # VMEM (tb, d_in)           input tile
                w_enc_ref,           # VMEM (d_in, hid_tile)     encoder weight tile
                b_enc_ref,           # VMEM (1, hid_tile)
                w_dec_ref,           # VMEM (hid_tile, d_in)     decoder weight tile
                b_dec_ref,           # VMEM (1, d_in)
                mean_ref,            # VMEM (1, d_in)
                recon_ref,           # VMEM (tb, d_in)   output (resident across hid axis)
                feat_ref,            # VMEM (tb, hid_tile) output
                xc_ref,              # VMEM scratch (tb, d_in)  standardized input (compute dtype)
                acc_ref):            # VMEM scratch (tb, d_in) f32 recon accumulator
    j = pl.program_id(1)

    @pl.when(j == 0)
    def _init():
        s = norm_ref[0]
        inv_s = 1.0 / s                      # scalar, once per batch tile
        x = x_ref[...].astype(jnp.float32)
        xc = (x - mean_ref[...]) * inv_s - b_dec_ref[...]
        xc_ref[...] = xc.astype(xc_ref.dtype)
        acc_ref[...] = jnp.zeros_like(acc_ref)

    # Encoder for this hidden tile (f32 accumulation on the MXU).
    xc = xc_ref[...]
    pre = jnp.dot(xc, w_enc_ref[...],
                  preferred_element_type=jnp.float32) + b_enc_ref[...]
    feats = jnp.maximum(pre, 0.0)
    feat_ref[...] = feats.astype(feat_ref.dtype)

    # Decoder contribution of this hidden tile, accumulated in f32.
    acc_ref[...] += jnp.dot(feats.astype(w_dec_ref.dtype), w_dec_ref[...],
                            preferred_element_type=jnp.float32)

    @pl.when(j == pl.num_programs(1) - 1)
    def _finalize():
        s = norm_ref[0]
        recon = (acc_ref[...] + b_dec_ref[...]) * s + mean_ref[...]
        recon_ref[...] = recon.astype(recon_ref.dtype)


def _vmem_estimate(tb, hid_tile, d_in, it_x, it_we, it_wd, it_f, it_xc):
    """Double-buffered block + scratch footprint (bytes)."""
    blocks = (tb * d_in * it_x                      # X block
              + d_in * hid_tile * it_we             # W_enc tile
              + hid_tile * d_in * it_wd             # W_dec tile
              + 8 * hid_tile * 4                    # b_enc (sublane-padded)
              + 2 * 8 * d_in * 4                    # b_dec + mean
              + tb * d_in * it_x                    # recon out block
              + tb * hid_tile * it_f)               # feats out block
    scratch = tb * d_in * (it_xc + 4)               # xc cache + f32 accumulator
    return 2 * blocks + scratch


def sparse_autoencoder_forward(X, W_enc, b_enc, W_dec, b_dec, mean, standard_norm,
                               *, tb=None, hid_tile=None, feat_dtype=jnp.float32):
    """Returns (reconstruction, feature_activations), matching the torch forward."""
    B, d_in = X.shape
    d_in_w, d_hid = W_enc.shape
    assert d_in_w == d_in and W_dec.shape == (d_hid, d_in)

    it_x = X.dtype.itemsize
    it_we = W_enc.dtype.itemsize
    it_wd = W_dec.dtype.itemsize
    it_f = jnp.dtype(feat_dtype).itemsize

    # Encoder-side compute dtype (feeds the MXU); f32 unless weights are lower precision.
    compute_dtype = W_enc.dtype if jnp.issubdtype(W_enc.dtype, jnp.floating) else jnp.float32
    it_xc = jnp.dtype(compute_dtype).itemsize

    # ---- tile selection (adaptive, v7x-safe VMEM budget) ---------------------
    vmem_budget = 40 << 20
    if tb is None:
        tb = min(256, _round_up(max(B, 8), 8))        # MXU-friendly batch tile
    tb = max(8, _round_up(tb, 8))
    if hid_tile is None:
        hid_tile = min(1024, _round_up(d_hid, 128))   # weight tile along d_hidden
    hid_tile = max(128, _round_up(hid_tile, 128))
    hid_tile = min(hid_tile, _round_up(d_hid, 128))

    while (_vmem_estimate(tb, hid_tile, d_in, it_x, it_we, it_wd, it_f, it_xc)
           > vmem_budget and hid_tile > 128):
        hid_tile = max(128, hid_tile // 2)
    while (_vmem_estimate(tb, hid_tile, d_in, it_x, it_we, it_wd, it_f, it_xc)
           > vmem_budget and tb > 8):
        tb = max(8, tb // 2)

    Bp = _round_up(B, tb)
    d_hid_p = _round_up(d_hid, hid_tile)

    # ---- caller-side zero padding (rows / hidden units sliced off below) ----
    if Bp != B:
        X = jnp.pad(X, ((0, Bp - B), (0, 0)))
    if d_hid_p != d_hid:
        W_enc = jnp.pad(W_enc, ((0, 0), (0, d_hid_p - d_hid)))
        b_enc = jnp.pad(b_enc, (0, d_hid_p - d_hid))
        W_dec = jnp.pad(W_dec, ((0, d_hid_p - d_hid), (0, 0)))

    b_enc2 = b_enc.astype(jnp.float32).reshape(1, d_hid_p)
    b_dec2 = b_dec.astype(jnp.float32).reshape(1, d_in)
    mean2 = mean.astype(jnp.float32).reshape(1, d_in)
    norm1 = jnp.asarray(standard_norm, jnp.float32).reshape(1)

    n_b = Bp // tb
    n_h = d_hid_p // hid_tile
    grid = (n_b, n_h)

    vmem_bytes = _vmem_estimate(tb, hid_tile, d_in, it_x, it_we, it_wd, it_f, it_xc)
    vmem_limit = int(min(max(vmem_bytes * 5 // 4, 32 << 20), 64 << 20))

    # ---- advisory cost estimate for the XLA scheduler ------------------------
    flops = 4.0 * Bp * d_in * d_hid_p                       # two matmuls
    bytes_accessed = (Bp * d_in * it_x                      # X read
                      + n_b * (d_in * d_hid_p * it_we + d_hid_p * d_in * it_wd)
                      + Bp * d_in * it_x                    # recon write
                      + Bp * d_hid_p * it_f)                # feats write
    cost = pl.CostEstimate(flops=int(flops), transcendentals=0,
                           bytes_accessed=int(bytes_accessed))

    recon, feats = pl.pallas_call(
        _sae_kernel,
        out_shape=(
            jax.ShapeDtypeStruct((Bp, d_in), X.dtype),
            jax.ShapeDtypeStruct((Bp, d_hid_p), feat_dtype),
        ),
        grid_spec=pltpu.PrefetchScalarGridSpec(
            num_scalar_prefetch=0,
            grid=grid,
            in_specs=[
                pl.BlockSpec(memory_space=pltpu.SMEM),                      # standard_norm
                pl.BlockSpec((tb, d_in), lambda i, j: (i, 0)),              # X
                pl.BlockSpec((d_in, hid_tile), lambda i, j: (0, j)),        # W_enc tile
                pl.BlockSpec((1, hid_tile), lambda i, j: (0, j)),           # b_enc tile
                pl.BlockSpec((hid_tile, d_in), lambda i, j: (j, 0)),        # W_dec tile
                pl.BlockSpec((1, d_in), lambda i, j: (0, 0)),               # b_dec
                pl.BlockSpec((1, d_in), lambda i, j: (0, 0)),               # mean
            ],
            out_specs=[
                pl.BlockSpec((tb, d_in), lambda i, j: (i, 0)),              # reconstruction
                pl.BlockSpec((tb, hid_tile), lambda i, j: (i, j)),          # feature activations
            ],
            scratch_shapes=[
                pltpu.VMEM((tb, d_in), compute_dtype),   # xc cache
                pltpu.VMEM((tb, d_in), jnp.float32),     # recon accumulator
            ],
        ),
        compiler_params=pltpu.CompilerParams(
            dimension_semantics=("parallel", "arbitrary"),
            vmem_limit_bytes=vmem_limit,
        ),
        cost_estimate=cost,
    )(norm1, X, W_enc.astype(compute_dtype), b_enc2, W_dec, b_dec2, mean2)

    return recon[:B], feats[:B, :d_hid]


def _init_params(key, d_input, d_hidden):
    """Deterministic init mirroring SparseAutoencoder.reset_parameters()."""
    k_dec, k_enc = jax.random.split(key)
    W_dec = jax.random.uniform(k_dec, (d_hidden, d_input), jnp.float32, -1.0, 1.0)
    W_dec = W_dec / jnp.linalg.norm(W_dec, axis=-1, keepdims=True)
    W_enc = jax.random.uniform(k_enc, (d_input, d_hidden), jnp.float32, -1.0, 1.0)
    W_enc = W_enc / jnp.linalg.norm(W_enc, axis=-1, keepdims=True)
    b_enc = jnp.zeros((d_hidden,), jnp.float32)
    b_dec = jnp.zeros((d_input,), jnp.float32)
    mean = jnp.zeros((d_input,), jnp.float32)
    standard_norm = jnp.float32(1.0)
    return W_enc, b_enc, W_dec, b_dec, mean, standard_norm


def _reference_forward(X, W_enc, b_enc, W_dec, b_dec, mean, standard_norm):
    xc = (X - mean) / standard_norm - b_dec
    feats = jnp.maximum(xc @ W_enc + b_enc, 0.0)
    recon = (feats @ W_dec + b_dec) * standard_norm + mean
    return recon, feats


if __name__ == "__main__":
    # Small but non-trivial shapes: batch (20) not a multiple of the batch tile,
    # d_hidden (200) not a multiple of the hidden tile -> exercises padding and
    # the multi-step (3 x 2) grid with the recon accumulator.
    d_input, d_hidden, batch = 128, 200, 20

    key = jax.random.PRNGKey(0)
    k_params, k_x, k_mean, k_be, k_bd = jax.random.split(key, 5)

    W_enc, b_enc, W_dec, b_dec, mean, standard_norm = _init_params(
        k_params, d_input, d_hidden)
    # Non-trivial biases / mean / norm to exercise the full forward path.
    b_enc = 0.01 * jax.random.normal(k_be, (d_hidden,), jnp.float32)
    b_dec = 0.01 * jax.random.normal(k_bd, (d_input,), jnp.float32)
    mean = 0.1 * jax.random.normal(k_mean, (d_input,), jnp.float32)
    standard_norm = jnp.float32(2.5)

    X = jax.random.normal(k_x, (batch, d_input), jnp.float32)

    recon, feats = sparse_autoencoder_forward(
        X, W_enc, b_enc, W_dec, b_dec, mean, standard_norm, tb=8, hid_tile=128)
    recon = jax.block_until_ready(recon)
    feats = jax.block_until_ready(feats)

    recon_ref, feats_ref = _reference_forward(
        X, W_enc, b_enc, W_dec, b_dec, mean, standard_norm)

    assert recon.shape == (batch, d_input) and feats.shape == (batch, d_hidden)
    assert jnp.allclose(recon, recon_ref, atol=1e-4, rtol=1e-4)
    assert jnp.allclose(feats, feats_ref, atol=1e-4, rtol=1e-4)
    print("KERNEL_OK")
</pallas_src>

<mosaic_0001>
module attributes {stable_mosaic.version = 11 : i64} {
  func.func @_sae_kernel(%arg0: i32, %arg1: i32, %arg2: memref<1xf32, #tpu.memory_space<smem>>, %arg3: memref<8x128xf32, #tpu.memory_space<vmem>>, %arg4: memref<128x128xf32, #tpu.memory_space<vmem>>, %arg5: memref<1x128xf32, #tpu.memory_space<vmem>>, %arg6: memref<128x128xf32, #tpu.memory_space<vmem>>, %arg7: memref<1x128xf32, #tpu.memory_space<vmem>>, %arg8: memref<1x128xf32, #tpu.memory_space<vmem>>, %arg9: memref<8x128xf32, #tpu.memory_space<vmem>>, %arg10: memref<8x128xf32, #tpu.memory_space<vmem>>, %arg11: memref<8x128xf32, #tpu.memory_space<vmem>>, %arg12: memref<8x128xf32, #tpu.memory_space<vmem>>) attributes {dimension_semantics = [#tpu.dimension_semantics<parallel>, #tpu.dimension_semantics<arbitrary>], iteration_bounds = array<i64: 3, 2>, scalar_prefetch = 0 : i64, scratch_operands = 2 : i64, tpu.core_type = #tpu.core_type<tc>, window_params = [{transform_indices = @transform_0, window_bounds = array<i64: 1>}, {transform_indices = @transform_1, window_bounds = array<i64: 8, 128>}, {transform_indices = @transform_2, window_bounds = array<i64: 128, 128>}, {transform_indices = @transform_3, window_bounds = array<i64: 1, 128>}, {transform_indices = @transform_4, window_bounds = array<i64: 128, 128>}, {pipeline_mode = #tpu.pipeline_mode<synchronous>, transform_indices = @transform_5, window_bounds = array<i64: 1, 128>}, {pipeline_mode = #tpu.pipeline_mode<synchronous>, transform_indices = @transform_6, window_bounds = array<i64: 1, 128>}, {transform_indices = @transform_7, window_bounds = array<i64: 8, 128>}, {transform_indices = @transform_8, window_bounds = array<i64: 8, 128>}]} {
    %c0_i32 = arith.constant 0 : i32
    %0 = arith.cmpi eq, %arg1, %c0_i32 : i32
    %1 = arith.extui %0 : i1 to i32
    %c0_i32_0 = arith.constant 0 : i32
    %2 = arith.cmpi ne, %1, %c0_i32_0 : i32
    scf.if %2 {
      %c0_17 = arith.constant 0 : index
      %20 = memref.load %arg2[%c0_17] : memref<1xf32, #tpu.memory_space<smem>>
      %cst_18 = arith.constant 1.000000e+00 : f32
      %21 = arith.divf %cst_18, %20 : f32
      %c0_19 = arith.constant 0 : index
      %c0_20 = arith.constant 0 : index
      %22 = vector.load %arg3[%c0_19, %c0_20] : memref<8x128xf32, #tpu.memory_space<vmem>>, vector<8x128xf32>
      %c0_21 = arith.constant 0 : index
      %c0_22 = arith.constant 0 : index
      %23 = vector.load %arg8[%c0_21, %c0_22] : memref<1x128xf32, #tpu.memory_space<vmem>>, vector<1x128xf32>
      %24 = vector.broadcast %23 : vector<1x128xf32> to vector<8x128xf32>
      %25 = arith.subf %22, %24 : vector<8x128xf32>
      %26 = vector.broadcast %21 : f32 to vector<8x128xf32>
      %27 = arith.mulf %25, %26 : vector<8x128xf32>
      %c0_23 = arith.constant 0 : index
      %c0_24 = arith.constant 0 : index
      %28 = vector.load %arg7[%c0_23, %c0_24] : memref<1x128xf32, #tpu.memory_space<vmem>>, vector<1x128xf32>
      %29 = vector.broadcast %28 : vector<1x128xf32> to vector<8x128xf32>
      %30 = arith.subf %27, %29 : vector<8x128xf32>
      %c0_25 = arith.constant 0 : index
      %c0_26 = arith.constant 0 : index
      %31 = vector.load %arg11[%c0_25, %c0_26] : memref<8x128xf32, #tpu.memory_space<vmem>>, vector<8x128xf32>
      tpu.vector_store %arg11[%c0_25, %c0_26], %30 {strides = array<i32>} : memref<8x128xf32, #tpu.memory_space<vmem>>, vector<8x128xf32>,
      %cst_27 = arith.constant 0.000000e+00 : f32
      %32 = vector.broadcast %cst_27 : f32 to vector<8x128xf32>
      %c0_28 = arith.constant 0 : index
      %c0_29 = arith.constant 0 : index
      %33 = vector.load %arg12[%c0_28, %c0_29] : memref<8x128xf32, #tpu.memory_space<vmem>>, vector<8x128xf32>
      tpu.vector_store %arg12[%c0_28, %c0_29], %32 {strides = array<i32>} : memref<8x128xf32, #tpu.memory_space<vmem>>, vector<8x128xf32>,
    } else {
    }
    %c0 = arith.constant 0 : index
    %c0_1 = arith.constant 0 : index
    %3 = vector.load %arg11[%c0, %c0_1] : memref<8x128xf32, #tpu.memory_space<vmem>>, vector<8x128xf32>
    %c0_2 = arith.constant 0 : index
    %c0_3 = arith.constant 0 : index
    %4 = vector.load %arg4[%c0_2, %c0_3] : memref<128x128xf32, #tpu.memory_space<vmem>>, vector<128x128xf32>
    %cst = arith.constant dense<0.000000e+00> : vector<8x128xf32>
    %5 = tpu.matmul %3, %4, %cst {dimension_numbers = #tpu.dot_dimension_numbers<[1], [0], [0], [1], [0, 0, 1, 1], [], []>} : vector<8x128xf32>, vector<128x128xf32>, vector<8x128xf32> -> vector<8x128xf32>
    %c0_4 = arith.constant 0 : index
    %c0_5 = arith.constant 0 : index
    %6 = vector.load %arg5[%c0_4, %c0_5] : memref<1x128xf32, #tpu.memory_space<vmem>>, vector<1x128xf32>
    %7 = vector.broadcast %6 : vector<1x128xf32> to vector<8x128xf32>
    %8 = arith.addf %5, %7 : vector<8x128xf32>
    %cst_6 = arith.constant 0.000000e+00 : f32
    %9 = vector.broadcast %cst_6 : f32 to vector<8x128xf32>
    %10 = arith.maximumf %8, %9 : vector<8x128xf32>
    %c0_7 = arith.constant 0 : index
    %c0_8 = arith.constant 0 : index
    %11 = vector.load %arg10[%c0_7, %c0_8] : memref<8x128xf32, #tpu.memory_space<vmem>>, vector<8x128xf32>
    tpu.vector_store %arg10[%c0_7, %c0_8], %10 {strides = array<i32>} : memref<8x128xf32, #tpu.memory_space<vmem>>, vector<8x128xf32>,
    %c0_9 = arith.constant 0 : index
    %c0_10 = arith.constant 0 : index
    %12 = vector.load %arg12[%c0_9, %c0_10] : memref<8x128xf32, #tpu.memory_space<vmem>>, vector<8x128xf32>
    %c0_11 = arith.constant 0 : index
    %c0_12 = arith.constant 0 : index
    %13 = vector.load %arg6[%c0_11, %c0_12] : memref<128x128xf32, #tpu.memory_space<vmem>>, vector<128x128xf32>
    %cst_13 = arith.constant dense<0.000000e+00> : vector<8x128xf32>
    %14 = tpu.matmul %10, %13, %cst_13 {dimension_numbers = #tpu.dot_dimension_numbers<[1], [0], [0], [1], [0, 0, 1, 1], [], []>} : vector<8x128xf32>, vector<128x128xf32>, vector<8x128xf32> -> vector<8x128xf32>
    %15 = arith.addf %12, %14 : vector<8x128xf32>
    %c0_14 = arith.constant 0 : index
    %c0_15 = arith.constant 0 : index
    %16 = vector.load %arg12[%c0_14, %c0_15] : memref<8x128xf32, #tpu.memory_space<vmem>>, vector<8x128xf32>
    tpu.vector_store %arg12[%c0_14, %c0_15], %15 {strides = array<i32>} : memref<8x128xf32, #tpu.memory_space<vmem>>, vector<8x128xf32>,
    %c1_i32 = arith.constant 1 : i32
    %17 = arith.cmpi eq, %arg1, %c1_i32 : i32
    %18 = arith.extui %17 : i1 to i32
    %c0_i32_16 = arith.constant 0 : i32
    %19 = arith.cmpi ne, %18, %c0_i32_16 : i32
    scf.if %19 {
      %c0_17 = arith.constant 0 : index
      %20 = memref.load %arg2[%c0_17] : memref<1xf32, #tpu.memory_space<smem>>
      %c0_18 = arith.constant 0 : index
      %c0_19 = arith.constant 0 : index
      %21 = vector.load %arg12[%c0_18, %c0_19] : memref<8x128xf32, #tpu.memory_space<vmem>>, vector<8x128xf32>
      %c0_20 = arith.constant 0 : index
      %c0_21 = arith.constant 0 : index
      %22 = vector.load %arg7[%c0_20, %c0_21] : memref<1x128xf32, #tpu.memory_space<vmem>>, vector<1x128xf32>
      %23 = vector.broadcast %22 : vector<1x128xf32> to vector<8x128xf32>
      %24 = arith.addf %21, %23 : vector<8x128xf32>
      %25 = vector.broadcast %20 : f32 to vector<8x128xf32>
      %26 = arith.mulf %24, %25 : vector<8x128xf32>
      %c0_22 = arith.constant 0 : index
      %c0_23 = arith.constant 0 : index
      %27 = vector.load %arg8[%c0_22, %c0_23] : memref<1x128xf32, #tpu.memory_space<vmem>>, vector<1x128xf32>
      %28 = vector.broadcast %27 : vector<1x128xf32> to vector<8x128xf32>
      %29 = arith.addf %26, %28 : vector<8x128xf32>
      %c0_24 = arith.constant 0 : index
      %c0_25 = arith.constant 0 : index
      %30 = vector.load %arg9[%c0_24, %c0_25] : memref<8x128xf32, #tpu.memory_space<vmem>>, vector<8x128xf32>
      tpu.vector_store %arg9[%c0_24, %c0_25], %29 {strides = array<i32>} : memref<8x128xf32, #tpu.memory_space<vmem>>, vector<8x128xf32>,
    } else {
    }
    return
  }
  func.func @transform_0(%arg0: i32, %arg1: i32) -> i32 {
    %c0_i32 = arith.constant 0 : i32
    %c0_i32_0 = arith.constant 0 : i32
    return %c0_i32 : i32
  }
  func.func @transform_1(%arg0: i32, %arg1: i32) -> (i32, i32) {
    %c0_i32 = arith.constant 0 : i32
    %c0_i32_0 = arith.constant 0 : i32
    return %arg0, %c0_i32 : i32, i32
  }
  func.func @transform_2(%arg0: i32, %arg1: i32) -> (i32, i32) {
    %c0_i32 = arith.constant 0 : i32
    %c0_i32_0 = arith.constant 0 : i32
    return %c0_i32, %arg1 : i32, i32
  }
  func.func @transform_3(%arg0: i32, %arg1: i32) -> (i32, i32) {
    %c0_i32 = arith.constant 0 : i32
    %c0_i32_0 = arith.constant 0 : i32
    return %c0_i32, %arg1 : i32, i32
  }
  func.func @transform_4(%arg0: i32, %arg1: i32) -> (i32, i32) {
    %c0_i32 = arith.constant 0 : i32
    %c0_i32_0 = arith.constant 0 : i32
    return %arg1, %c0_i32 : i32, i32
  }
  func.func @transform_5(%arg0: i32, %arg1: i32) -> (i32, i32) {
    %c0_i32 = arith.constant 0 : i32
    %c0_i32_0 = arith.constant 0 : i32
    %c0_i32_1 = arith.constant 0 : i32
    return %c0_i32, %c0_i32_0 : i32, i32
  }
  func.func @transform_6(%arg0: i32, %arg1: i32) -> (i32, i32) {
    %c0_i32 = arith.constant 0 : i32
    %c0_i32_0 = arith.constant 0 : i32
    %c0_i32_1 = arith.constant 0 : i32
    return %c0_i32, %c0_i32_0 : i32, i32
  }
  func.func @transform_7(%arg0: i32, %arg1: i32) -> (i32, i32) {
    %c0_i32 = arith.constant 0 : i32
    %c0_i32_0 = arith.constant 0 : i32
    return %arg0, %c0_i32 : i32, i32
  }
  func.func @transform_8(%arg0: i32, %arg1: i32) -> (i32, i32) {
    %c0_i32 = arith.constant 0 : i32
    return %arg0, %arg1 : i32, i32
  }
}

</mosaic_0001>

<llo_original>
// kernel: tpu_custom_call.1
$region0: #{tpu_custom_call.1}
  #allocation0 [shape = 'u32[]', space=smem, size = 0x4, offset = 0x4, fixed_abs, tag = 'smem constant byte address 0x4 - core index']
  #allocation1 [shape = 'u32[144,128]{1,0:T(1,128)}', space=vmem, size = 0x12000, scoped, tag = 'internal scratch']
  #allocation2 [shape = 'f32[8,128]{1,0:T(8,128)}', space=vmem, size = 0x1000, scoped, tag = 'scratch operand']
  #allocation3 [shape = 'f32[8,128]{1,0:T(8,128)}', space=vmem, size = 0x1000, scoped, tag = 'scratch operand']
  #allocation4 [shape = 'f32[1]{0:T(128)S(6)}', space=smem, size = 0x200, scoped, tag = 'scoped memory for tpu_custom_call.1']
  %s0 = inlined_call_operand.<no memory space> [shape: f32[1], index: 0, kind: input, shape index: {}]
  %s1 = inlined_call_operand.hbm [shape: f32[24,128], index: 1, kind: input, shape index: {}]
  %s2 = inlined_call_operand.hbm [shape: f32[128,256], index: 2, kind: input, shape index: {}]
  %s3 = inlined_call_operand.vmem [shape: f32[1,256], index: 3, kind: input, shape index: {}]
  %s4 = inlined_call_operand.hbm [shape: f32[256,128], index: 4, kind: input, shape index: {}]
  %s5 = inlined_call_operand.vmem [shape: f32[1,128], index: 5, kind: input, shape index: {}]
  %s6 = inlined_call_operand.vmem [shape: f32[1,128], index: 6, kind: input, shape index: {}]
  %s7 = inlined_call_operand.hbm [shape: f32[24,128], index: 7, kind: output, shape index: {0}]
  %s8 = inlined_call_operand.hbm [shape: f32[24,256], index: 8, kind: output, shape index: {1}]
  %9 = xla_tuple %s7, %s8
  %s10 = sld [smem:[#allocation0]]
  $region89: #{tpu_custom_call.1} parent=0
    _
  %s12 = ssub.s32 1, %s10
  %s13 = scalar_select 0, %s12, %s10
  %14 = sst [smem:[#allocation4]] %s0
  $region1: #{tpu_custom_call.1} parent=0
    #allocation5 [shape = 'u8[8192]{0}', space=vmem, size = 0x2000, scoped, tag = 'input window, operand 1']
    #allocation6 [shape = 's32[2]{0}', space=sflag, size = 0x8, scoped, tag = 'scoped memory for tpu_custom_call.1']
    #allocation7 [shape = 's32[2]{0}', space=sflag, size = 0x8, scoped, tag = 'scoped memory for tpu_custom_call.1']
    #allocation8 [shape = 'u8[131072]{0}', space=vmem, size = 0x20000, scoped, tag = 'input window, operand 2']
    #allocation9 [shape = 's32[2]{0}', space=sflag, size = 0x8, scoped, tag = 'scoped memory for tpu_custom_call.1']
    #allocation10 [shape = 'u8[131072]{0}', space=vmem, size = 0x20000, scoped, tag = 'input window, operand 4']
    #allocation11 [shape = 'u8[8192]{0}', space=vmem, size = 0x2000, scoped, tag = 'output window, operand 0']
    #allocation12 [shape = 'u8[8192]{0}', space=vmem, size = 0x2000, scoped, tag = 'output window, operand 1']
    #allocation13 [shape = 's32[2]{0}', space=sflag, size = 0x8, scoped, tag = 'scoped memory for tpu_custom_call.1']
    %15 = vsyncpa [#allocation6], 0
    %s16 = scalar_lea.sflag [#allocation6], 1
    %17 = vsyncpa %s16, 0
    %18 = vsyncpa [#allocation9], 0
    %s19 = scalar_lea.sflag [#allocation9], 1
    %20 = vsyncpa %s19, 0
    %21 = vsyncpa [#allocation7], 0
    %s22 = scalar_lea.sflag [#allocation7], 1
    %23 = vsyncpa %s22, 0
    %24 = vsyncpa [#allocation13], 0
    %s25 = scalar_lea.sflag [#allocation13], 1
    %26 = vsyncpa %s25, 0
    loop: start=0, step=1, limit=8
    $region2: #{tpu_custom_call.1} parent=1 // loop_pre_header
      _
    $region3: #{tpu_custom_call.1} parent=1 // loop_header
      %s28 = sphi 0, %s32
      %p29 = scmp.ge.s32.totalorder %s28, 8
      %s35 = sphi 0, %s47
      %s36 = sphi 0, %s43
      %s37 = sphi 0, %s35
      %s38 = sphi 0, %s36
      %s39 = sphi 0, %s37
      %s40 = sphi 0, %s38
      %s48 = sphi 0, %s48
      %s50 = sphi 0, %s48
      %s51 = sphi 0, %s50
      %s65 = sphi 0, %s51
      %s71 = sphi 0, %s73
      %s74 = sphi 0, %s71
      %s75 = sphi 0, %s74
      %s91 = sphi 0, %s75
      %s97 = sphi 0, %s99
      %s100 = sphi 0, %s97
      %s101 = sphi 0, %s100
      %s117 = sphi 0, %s101
      %s123 = sphi 0, %s125
      %s126 = sphi 0, %s123
      %s127 = sphi 0, %s126
      %s143 = sphi 0, %s127
      %s149 = sphi 0, %s151
      %s152 = sphi 0, %s149
      %s153 = sphi 0, %s152
      %s169 = sphi 0, %s153
      %s173 = sphi 0, %s173
      %s175 = sphi 0, %s173
      %s176 = sphi 0, %s175
      %s190 = sphi 0, %s176
      %s194 = sphi 0, %s194
      %s196 = sphi 0, %s194
      %s197 = sphi 0, %s196
      %s211 = sphi 0, %s197
      %s217 = sphi 0, %s219
      %s220 = sphi 0, %s217
      %s221 = sphi 0, %s220
      %s237 = sphi 0, %s221
      %s245 = sphi 0, %s247
      %s248 = sphi 0, %s245
      %s249 = sphi 0, %s248
      %s265 = sphi 0, %s249
    $region4: #{tpu_custom_call.1} parent=1 // loop_header_branch
      %31 = sbr.rel (%p29) target = $region8
    $region5: #{tpu_custom_call.1} parent=1 // loop_body
      %s33 = ssub.s32 %s28, 1
      %s34 = ssub.s32 %s28, 2
      %s41 = sadd.s32 1, %s36
      %p42 = scmp.ge.s32.totalorder %s41, 2
      %s43 = scalar_select %p42, 0, %s41
      %s44 = sadd.s32 1, %s35
      %s45 = scalar_select %p42, %s44, %s35
      %p46 = scmp.ge.s32.totalorder %s45, 3
      %s47 = scalar_select %p46, 0, %s45
      %s49 = sadd.s32 %s48, 1
      %p52 = scmp.eq.s32.totalorder %s28, 5
      %p53 = scmp.ne.s32.totalorder %s48, %s50
      %p54 = scmp.eq.s32.totalorder %s28, 0
      %p55 = por %p53, %p54
      %p56 = scmp.ne.s32.totalorder %s48, %s50
      %p57 = scmp.eq.s32.totalorder %s33, 5
      %p58 = por %p56, %p57
      %p59 = scmp.ne.s32.totalorder %s50, %s51
      %p60 = scmp.eq.s32.totalorder %s33, 0
      %p61 = por %p59, %p60
      %p62 = scmp.ne.s32.totalorder %s50, %s51
      %p63 = scmp.eq.s32.totalorder %s34, 5
      %p64 = por %p62, %p63
      %p66 = scmp.ne.s32.totalorder %s51, %s65
      %p67 = scmp.eq.s32.totalorder %s34, 0
      %p68 = por %p66, %p67
      %s69 = ssub.s32 %s35, %s47
      %p70 = scmp.eq.s32.totalorder %s69, 0
      %s72 = sadd.s32 %s71, 1
      %s73 = scalar_select %p70, %s71, %s72
      %p76 = pneg %p70
      %p77 = scmp.eq.s32.totalorder %s28, 5
      %p78 = por %p76, %p77
      %p79 = scmp.ne.s32.totalorder %s71, %s74
      %p80 = scmp.eq.s32.totalorder %s28, 0
      %p81 = por %p79, %p80
      %p82 = scmp.ne.s32.totalorder %s71, %s74
      %p83 = scmp.eq.s32.totalorder %s33, 5
      %p84 = por %p82, %p83
      %p85 = scmp.ne.s32.totalorder %s74, %s75
      %p86 = scmp.eq.s32.totalorder %s33, 0
      %p87 = por %p85, %p86
      %p88 = scmp.ne.s32.totalorder %s74, %s75
      %p89 = scmp.eq.s32.totalorder %s34, 5
      %p90 = por %p88, %p89
      %p92 = scmp.ne.s32.totalorder %s75, %s91
      %p93 = scmp.eq.s32.totalorder %s34, 0
      %p94 = por %p92, %p93
      %s95 = ssub.s32 %s36, %s43
      %p96 = scmp.eq.s32.totalorder %s95, 0
      %s98 = sadd.s32 %s97, 1
      %s99 = scalar_select %p96, %s97, %s98
      %p102 = pneg %p96
      %p103 = scmp.eq.s32.totalorder %s28, 5
      %p104 = por %p102, %p103
      %p105 = scmp.ne.s32.totalorder %s97, %s100
      %p106 = scmp.eq.s32.totalorder %s28, 0
      %p107 = por %p105, %p106
      %p108 = scmp.ne.s32.totalorder %s97, %s100
      %p109 = scmp.eq.s32.totalorder %s33, 5
      %p110 = por %p108, %p109
      %p111 = scmp.ne.s32.totalorder %s100, %s101
      %p112 = scmp.eq.s32.totalorder %s33, 0
      %p113 = por %p111, %p112
      %p114 = scmp.ne.s32.totalorder %s100, %s101
      %p115 = scmp.eq.s32.totalorder %s34, 5
      %p116 = por %p114, %p115
      %p118 = scmp.ne.s32.totalorder %s101, %s117
      %p119 = scmp.eq.s32.totalorder %s34, 0
      %p120 = por %p118, %p119
      %s121 = ssub.s32 %s36, %s43
      %p122 = scmp.eq.s32.totalorder %s121, 0
      %s124 = sadd.s32 %s123, 1
      %s125 = scalar_select %p122, %s123, %s124
      %p128 = pneg %p122
      %p129 = scmp.eq.s32.totalorder %s28, 5
      %p130 = por %p128, %p129
      %p131 = scmp.ne.s32.totalorder %s123, %s126
      %p132 = scmp.eq.s32.totalorder %s28, 0
      %p133 = por %p131, %p132
      %p134 = scmp.ne.s32.totalorder %s123, %s126
      %p135 = scmp.eq.s32.totalorder %s33, 5
      %p136 = por %p134, %p135
      %p137 = scmp.ne.s32.totalorder %s126, %s127
      %p138 = scmp.eq.s32.totalorder %s33, 0
      %p139 = por %p137, %p138
      %p140 = scmp.ne.s32.totalorder %s126, %s127
      %p141 = scmp.eq.s32.totalorder %s34, 5
      %p142 = por %p140, %p141
      %p144 = scmp.ne.s32.totalorder %s127, %s143
      %p145 = scmp.eq.s32.totalorder %s34, 0
      %p146 = por %p144, %p145
      %s147 = ssub.s32 %s36, %s43
      %p148 = scmp.eq.s32.totalorder %s147, 0
      %s150 = sadd.s32 %s149, 1
      %s151 = scalar_select %p148, %s149, %s150
      %p154 = pneg %p148
      %p155 = scmp.eq.s32.totalorder %s28, 5
      %p156 = por %p154, %p155
      %p157 = scmp.ne.s32.totalorder %s149, %s152
      %p158 = scmp.eq.s32.totalorder %s28, 0
      %p159 = por %p157, %p158
      %p160 = scmp.ne.s32.totalorder %s149, %s152
      %p161 = scmp.eq.s32.totalorder %s33, 5
      %p162 = por %p160, %p161
      %p163 = scmp.ne.s32.totalorder %s152, %s153
      %p164 = scmp.eq.s32.totalorder %s33, 0
      %p165 = por %p163, %p164
      %p166 = scmp.ne.s32.totalorder %s152, %s153
      %p167 = scmp.eq.s32.totalorder %s34, 5
      %p168 = por %p166, %p167
      %p170 = scmp.ne.s32.totalorder %s153, %s169
      %p171 = scmp.eq.s32.totalorder %s34, 0
      %p172 = por %p170, %p171
      %s174 = sadd.s32 %s173, 1
      %p177 = scmp.eq.s32.totalorder %s28, 5
      %p178 = scmp.ne.s32.totalorder %s173, %s175
      %p179 = scmp.eq.s32.totalorder %s28, 0
      %p180 = por %p178, %p179
      %p181 = scmp.ne.s32.totalorder %s173, %s175
      %p182 = scmp.eq.s32.totalorder %s33, 5
      %p183 = por %p181, %p182
      %p184 = scmp.ne.s32.totalorder %s175, %s176
      %p185 = scmp.eq.s32.totalorder %s33, 0
      %p186 = por %p184, %p185
      %p187 = scmp.ne.s32.totalorder %s175, %s176
      %p188 = scmp.eq.s32.totalorder %s34, 5
      %p189 = por %p187, %p188
      %p191 = scmp.ne.s32.totalorder %s176, %s190
      %p192 = scmp.eq.s32.totalorder %s34, 0
      %p193 = por %p191, %p192
      %s195 = sadd.s32 %s194, 1
      %p198 = scmp.eq.s32.totalorder %s28, 5
      %p199 = scmp.ne.s32.totalorder %s194, %s196
      %p200 = scmp.eq.s32.totalorder %s28, 0
      %p201 = por %p199, %p200
      %p202 = scmp.ne.s32.totalorder %s194, %s196
      %p203 = scmp.eq.s32.totalorder %s33, 5
      %p204 = por %p202, %p203
      %p205 = scmp.ne.s32.totalorder %s196, %s197
      %p206 = scmp.eq.s32.totalorder %s33, 0
      %p207 = por %p205, %p206
      %p208 = scmp.ne.s32.totalorder %s196, %s197
      %p209 = scmp.eq.s32.totalorder %s34, 5
      %p210 = por %p208, %p209
      %p212 = scmp.ne.s32.totalorder %s197, %s211
      %p213 = scmp.eq.s32.totalorder %s34, 0
      %p214 = por %p212, %p213
      %s215 = ssub.s32 %s35, %s47
      %p216 = scmp.eq.s32.totalorder %s215, 0
      %s218 = sadd.s32 %s217, 1
      %s219 = scalar_select %p216, %s217, %s218
      %p222 = pneg %p216
      %p223 = scmp.eq.s32.totalorder %s28, 5
      %p224 = por %p222, %p223
      %p225 = scmp.ne.s32.totalorder %s217, %s220
      %p226 = scmp.eq.s32.totalorder %s28, 0
      %p227 = por %p225, %p226
      %p228 = scmp.ne.s32.totalorder %s217, %s220
      %p229 = scmp.eq.s32.totalorder %s33, 5
      %p230 = por %p228, %p229
      %p231 = scmp.ne.s32.totalorder %s220, %s221
      %p232 = scmp.eq.s32.totalorder %s33, 0
      %p233 = por %p231, %p232
      %p234 = scmp.ne.s32.totalorder %s220, %s221
      %p235 = scmp.eq.s32.totalorder %s34, 5
      %p236 = por %p234, %p235
      %p238 = scmp.ne.s32.totalorder %s221, %s237
      %p239 = scmp.eq.s32.totalorder %s34, 0
      %p240 = por %p238, %p239
      %s241 = ssub.s32 %s35, %s47
      %s242 = ssub.s32 %s36, %s43
      %s243 = sor.u32 %s241, %s242
      %p244 = scmp.eq.s32.totalorder %s243, 0
      %s246 = sadd.s32 %s245, 1
      %s247 = scalar_select %p244, %s245, %s246
      %p250 = pneg %p244
      %p251 = scmp.eq.s32.totalorder %s28, 5
      %p252 = por %p250, %p251
      %p253 = scmp.ne.s32.totalorder %s245, %s248
      %p254 = scmp.eq.s32.totalorder %s28, 0
      %p255 = por %p253, %p254
      %p256 = scmp.ne.s32.totalorder %s245, %s248
      %p257 = scmp.eq.s32.totalorder %s33, 5
      %p258 = por %p256, %p257
      %p259 = scmp.ne.s32.totalorder %s248, %s249
      %p260 = scmp.eq.s32.totalorder %s33, 0
      %p261 = por %p259, %p260
      %p262 = scmp.ne.s32.totalorder %s248, %s249
      %p263 = scmp.eq.s32.totalorder %s34, 5
      %p264 = por %p262, %p263
      %p266 = scmp.ne.s32.totalorder %s249, %s265
      %p267 = scmp.eq.s32.totalorder %s34, 0
      %p268 = por %p266, %p267
      %p269 = scmp.le.s32.totalorder 1, %s28
      %p270 = scmp.lt.s32.totalorder %s28, 7
      %p271 = pnand %p269, %p270
      %p272 = pneg %p271
      // Predicated region
      $region9: #{tpu_custom_call.1} parent=5 // pred_check
        _
      $region10: #{tpu_custom_call.1} parent=5 // pred_check_branch
        %274 = sbr.rel (%p271) target = $region12
      $region11: #{tpu_custom_call.1} parent=5 // pred_region
        %s275 = ssub.s32 %s28, 1
        // Predicated region
        $region13: #{tpu_custom_call.1} parent=11 // pred_check
          %p276 = pneg %p61
        $region14: #{tpu_custom_call.1} parent=11 // pred_check_branch
          %278 = sbr.rel (%p276) target = $region16
        $region15: #{tpu_custom_call.1} parent=11 // pred_region
          _
        $region16: #{tpu_custom_call.1} parent=11 // pred_fallthru
          _
        // Predicated region
        $region17: #{tpu_custom_call.1} parent=11 // pred_check
          %p279 = pneg %p186
        $region18: #{tpu_custom_call.1} parent=11 // pred_check_branch
          %281 = sbr.rel (%p279) target = $region20
        $region19: #{tpu_custom_call.1} parent=11 // pred_region
          _
        $region20: #{tpu_custom_call.1} parent=11 // pred_fallthru
          _
        // Predicated region
        $region21: #{tpu_custom_call.1} parent=11 // pred_check
          %p282 = pneg %p207
        $region22: #{tpu_custom_call.1} parent=11 // pred_check_branch
          %284 = sbr.rel (%p282) target = $region24
        $region23: #{tpu_custom_call.1} parent=11 // pred_region
          _
        $region24: #{tpu_custom_call.1} parent=11 // pred_fallthru
          _
      $region12: #{tpu_custom_call.1} parent=5 // pred_fallthru
        _
      %p285 = scmp.lt.s32.totalorder %s28, 6
      // Predicated region
      $region25: #{tpu_custom_call.1} parent=5 // pred_check
        %p286 = pneg %p285
      $region26: #{tpu_custom_call.1} parent=5 // pred_check_branch
        %288 = sbr.rel (%p286) target = $region28
      $region27: #{tpu_custom_call.1} parent=5 // pred_region
        // Predicated region
        $region29: #{tpu_custom_call.1} parent=27 // pred_check
          %p289 = pneg %p81
        $region30: #{tpu_custom_call.1} parent=27 // pred_check_branch
          %291 = sbr.rel (%p289) target = $region32
        $region31: #{tpu_custom_call.1} parent=27 // pred_region
          %s292 = sand.u32 %s71, 1
          %s293 = scalar_lea.sflag [#allocation6], %s292
          %s294 = sand.u32 %s71, 1
          %s295 = smul.addr %s294, 8
          %s296 = scalar_lea.vmem [#allocation5], %s295
          %s298 = ssub.s32 128, 128
          %299 = vsyncadd %s293, %s298
          %s300 = smul.addr %s35, 128
          %s301 = scalar_lea.hbm %s1, %s300
          %s303 = sshll.u32 %s296, 4
          %s304 = int_to_ptr.vmem [resolvable:$true] %s303
          %306 = dma.hbm_to_vmem [thread:$0]  %s301, 128, %s304, %s293
        $region32: #{tpu_custom_call.1} parent=27 // pred_fallthru
          _
        // Predicated region
        $region33: #{tpu_custom_call.1} parent=27 // pred_check
          %p307 = pneg %p107
        $region34: #{tpu_custom_call.1} parent=27 // pred_check_branch
          %309 = sbr.rel (%p307) target = $region36
        $region35: #{tpu_custom_call.1} parent=27 // pred_region
          %s310 = sand.u32 %s28, 1
          %s311 = scalar_lea.sflag [#allocation9], %s310
          %s312 = sand.u32 %s97, 1
          %s313 = smul.addr %s312, 128
          %s314 = scalar_lea.vmem [#allocation8], %s313
          %s316 = ssub.s32 2048, 2048
          %317 = vsyncadd %s311, %s316
          %s318 = smul.addr %s36, 128
          %s319 = scalar_lea.hbm %s2, %s318
          %s320 = sshll.u32 %s314, 4
          %s321 = int_to_ptr.vmem [resolvable:$true] %s320
          %326 = dma.hbm_to_vmem [thread:$0]  %s319, 2048, %s321, %s311, 256, 128, 8
        $region36: #{tpu_custom_call.1} parent=27 // pred_fallthru
          _
        // Predicated region
        $region37: #{tpu_custom_call.1} parent=27 // pred_check
          %p327 = pneg %p133
        $region38: #{tpu_custom_call.1} parent=27 // pred_check_branch
          %329 = sbr.rel (%p327) target = $region40
        $region39: #{tpu_custom_call.1} parent=27 // pred_region
          %p330 = scmp.lt.s32.totalorder %s36, 1
          %s331 = scalar_select %p330, %s36, 1
          %s332 = scalar_lea.vmem %s3, %s331
        $region40: #{tpu_custom_call.1} parent=27 // pred_fallthru
          _
        // Predicated region
        $region41: #{tpu_custom_call.1} parent=27 // pred_check
          %p333 = pneg %p159
        $region42: #{tpu_custom_call.1} parent=27 // pred_check_branch
          %335 = sbr.rel (%p333) target = $region44
        $region43: #{tpu_custom_call.1} parent=27 // pred_region
          %s336 = sand.u32 %s28, 1
          %s337 = scalar_lea.sflag [#allocation9], %s336
          %s338 = sand.u32 %s149, 1
          %s339 = smul.addr %s338, 128
          %s340 = scalar_lea.vmem [#allocation10], %s339
          %s341 = smul.u32 16, %s36
          %s343 = ssub.s32 2048, 2048
          %344 = vsyncadd %s337, %s343
          %s345 = smul.addr %s341, 128
          %s346 = scalar_lea.hbm %s4, %s345
          %s347 = sshll.u32 %s340, 4
          %s348 = int_to_ptr.vmem [resolvable:$true] %s347
          %353 = dma.hbm_to_vmem [thread:$0]  %s346, 2048, %s348, %s337, 128, 128, 8
        $region44: #{tpu_custom_call.1} parent=27 // pred_fallthru
          _
      $region28: #{tpu_custom_call.1} parent=5 // pred_fallthru
        _
      %p354 = scmp.le.s32.totalorder 1, %s28
      %p355 = scmp.lt.s32.totalorder %s28, 7
      %p356 = pnand %p354, %p355
      %p357 = pneg %p356
      // Predicated region
      $region45: #{tpu_custom_call.1} parent=5 // pred_check
        _
      $region46: #{tpu_custom_call.1} parent=5 // pred_check_branch
        %359 = sbr.rel (%p356) target = $region48
      $region47: #{tpu_custom_call.1} parent=5 // pred_region
        %s360 = ssub.s32 %s28, 1
        %s361 = sand.u32 %s74, 1
        %s362 = scalar_lea.sflag [#allocation6], %s361
        %s363 = sand.u32 %s74, 1
        %s364 = smul.addr %s363, 8
        %s365 = scalar_lea.vmem [#allocation5], %s364
        // Predicated region
        $region49: #{tpu_custom_call.1} parent=47 // pred_check
          %p366 = pneg %p87
        $region50: #{tpu_custom_call.1} parent=47 // pred_check_branch
          %368 = sbr.rel (%p366) target = $region52
        $region51: #{tpu_custom_call.1} parent=47 // pred_region
          %369 = dma.done %s362, 128
        $region52: #{tpu_custom_call.1} parent=47 // pred_fallthru
          _
        %s370 = sand.u32 %s33, 1
        %s371 = scalar_lea.sflag [#allocation9], %s370
        %s372 = sand.u32 %s100, 1
        %s373 = smul.addr %s372, 128
        %s374 = scalar_lea.vmem [#allocation8], %s373
        // Predicated region
        $region53: #{tpu_custom_call.1} parent=47 // pred_check
          %p375 = pneg %p113
        $region54: #{tpu_custom_call.1} parent=47 // pred_check_branch
          %377 = sbr.rel (%p375) target = $region56
        $region55: #{tpu_custom_call.1} parent=47 // pred_region
          %378 = dma.done %s371, 2048
        $region56: #{tpu_custom_call.1} parent=47 // pred_fallthru
          _
        %s379 = sand.u32 %s33, 1
        %s380 = scalar_lea.sflag [#allocation9], %s379
        %s381 = sand.u32 %s152, 1
        %s382 = smul.addr %s381, 128
        %s383 = scalar_lea.vmem [#allocation10], %s382
        // Predicated region
        $region57: #{tpu_custom_call.1} parent=47 // pred_check
          %p384 = pneg %p165
        $region58: #{tpu_custom_call.1} parent=47 // pred_check_branch
          %386 = sbr.rel (%p384) target = $region60
        $region59: #{tpu_custom_call.1} parent=47 // pred_region
          %387 = dma.done %s380, 2048
        $region60: #{tpu_custom_call.1} parent=47 // pred_fallthru
          _
        %p388 = pneg %p61
        %p389 = pneg %p58
        %s390 = sand.u32 %s74, 1
        %s391 = scalar_lea.sflag [#allocation6], %s390
        %s392 = sand.u32 %s74, 1
        %s393 = smul.addr %s392, 8
        %s394 = scalar_lea.vmem [#allocation5], %s393
        %p395 = pneg %p87
        %p396 = pneg %p84
        %s397 = sand.u32 %s33, 1
        %s398 = scalar_lea.sflag [#allocation9], %s397
        %s399 = sand.u32 %s100, 1
        %s400 = smul.addr %s399, 128
        %s401 = scalar_lea.vmem [#allocation8], %s400
        %p402 = pneg %p113
        %p403 = pneg %p110
        %p404 = scmp.lt.s32.totalorder %s38, 1
        %s405 = scalar_select %p404, %s38, 1
        %s406 = scalar_lea.vmem %s3, %s405
        %p407 = pneg %p139
        %p408 = pneg %p136
        %s409 = sand.u32 %s33, 1
        %s410 = scalar_lea.sflag [#allocation9], %s409
        %s411 = sand.u32 %s152, 1
        %s412 = smul.addr %s411, 128
        %s413 = scalar_lea.vmem [#allocation10], %s412
        %p414 = pneg %p165
        %p415 = pneg %p162
        %p416 = pneg %p186
        %p417 = pneg %p183
        %p418 = pneg %p207
        %p419 = pneg %p204
        %p420 = pneg %p233
        %p421 = pneg %p230
        %s422 = sand.u32 %s220, 1
        %s423 = scalar_lea.sflag [#allocation7], %s422
        %s424 = sand.u32 %s220, 1
        %s425 = smul.addr %s424, 8
        %s426 = scalar_lea.vmem [#allocation11], %s425
        %p427 = pneg %p261
        %p428 = pneg %p258
        %s429 = sand.u32 %s248, 1
        %s430 = scalar_lea.sflag [#allocation13], %s429
        %s431 = sand.u32 %s248, 1
        %s432 = smul.addr %s431, 8
        %s433 = scalar_lea.vmem [#allocation12], %s432
        %p434 = scmp.lt.s32.totalorder %s38, 1
        %s435 = scalar_select %p434, %s38, 1
        %s436 = scalar_lea.vmem %s3, %s435
        %s437 = smul.u32 16, %s38
        %p438 = scmp.eq.s32.totalorder %s38, 0
        // Predicated region
        $region61: #{tpu_custom_call.1} parent=47 // pred_check
          %p439 = pneg %p438
        $region62: #{tpu_custom_call.1} parent=47 // pred_check_branch
          %441 = sbr.rel (%p439) target = $region64
        $region63: #{tpu_custom_call.1} parent=47 // pred_region
          %s442 = sld [smem:[#allocation4]]
          %v443 = vstv %s442
          %v444 = vrcp.pop %v443
          %s445 = vtos %v444
          %v446 = vld [vmem:[%s365] sm:$0xff]
          %v447 = vld [vmem:[%s6] sm:$0x1]
          %v449 = vlaneseq
          %v450 = vshrl.u32 %v449, 7
          %v451 = vsub.s32 0, %v450
          %v452 = vrot.slane %v447, %v451
          %v454 = vsub.f32 %v446, %v452
          %v455 = vstv %s445
          %v456 = vmul.f32 %v454, %v455
          %v457 = vld [vmem:[%s5] sm:$0x1]
          %v459 = vlaneseq
          %v460 = vshrl.u32 %v459, 7
          %v461 = vsub.s32 0, %v460
          %v462 = vrot.slane %v457, %v461
          %v464 = vsub.f32 %v456, %v462
          %465 = vst [vmem:[#allocation2] sm:$0xff] %v464
          %466 = vst [vmem:[#allocation3] sm:$0xff] 0.0
        $region64: #{tpu_custom_call.1} parent=47 // pred_fallthru
          _
        %v467 = vld [vmem:[#allocation2] sm:$0xff]
        %v468 = vld [vmem:[%s374] sm:$0xff]
        %v469 = vld [vmem:[%s374 + $0x8] sm:$0xff]
        %v470 = vld [vmem:[%s374 + $0x10] sm:$0xff]
        %v471 = vld [vmem:[%s374 + $0x18] sm:$0xff]
        %v472 = vld [vmem:[%s374 + $0x20] sm:$0xff]
        %v473 = vld [vmem:[%s374 + $0x28] sm:$0xff]
        %v474 = vld [vmem:[%s374 + $0x30] sm:$0xff]
        %v475 = vld [vmem:[%s374 + $0x38] sm:$0xff]
        %v476 = vld [vmem:[%s374 + $0x40] sm:$0xff]
        %v477 = vld [vmem:[%s374 + $0x48] sm:$0xff]
        %v478 = vld [vmem:[%s374 + $0x50] sm:$0xff]
        %v479 = vld [vmem:[%s374 + $0x58] sm:$0xff]
        %v480 = vld [vmem:[%s374 + $0x60] sm:$0xff]
        %v481 = vld [vmem:[%s374 + $0x68] sm:$0xff]
        %v482 = vld [vmem:[%s374 + $0x70] sm:$0xff]
        %v483 = vld [vmem:[%s374 + $0x78] sm:$0xff]
        %v484 = vld [vmem:[%s436] sm:$0x1]
        %v486 = vlaneseq
        %v487 = vshrl.u32 %v486, 7
        %v488 = vsub.s32 0, %v487
        %v489 = vrot.slane %v484, %v488
        %491 = vmatprep.subr.mxu0 0.0
        %492 = vmatpush1.msra.mxu0 %v468
        %493 = vmatprep.subr.mxu0 0.0
        %494 = vmatpush1.msra.mxu0 %v469
        %495 = vmatprep.subr.mxu0 0.0
        %496 = vmatpush1.msra.mxu0 %v470
        %497 = vmatprep.subr.mxu0 0.0
        %498 = vmatpush1.msra.mxu0 %v471
        %499 = vmatprep.subr.mxu0 0.0
        %500 = vmatpush1.msra.mxu0 %v472
        %501 = vmatprep.subr.mxu0 0.0
        %502 = vmatpush1.msra.mxu0 %v473
        %503 = vmatprep.subr.mxu0 0.0
        %504 = vmatpush1.msra.mxu0 %v474
        %505 = vmatprep.subr.mxu0 0.0
        %506 = vmatpush1.msra.mxu0 %v475
        %507 = vmatprep.subr.mxu0 0.0
        %508 = vmatpush1.msra.mxu0 %v476
        %509 = vmatprep.subr.mxu0 0.0
        %510 = vmatpush1.msra.mxu0 %v477
        %511 = vmatprep.subr.mxu0 0.0
        %512 = vmatpush1.msra.mxu0 %v478
        %513 = vmatprep.subr.mxu0 0.0
        %514 = vmatpush1.msra.mxu0 %v479
        %515 = vmatprep.subr.mxu0 0.0
        %516 = vmatpush1.msra.mxu0 %v480
        %517 = vmatprep.subr.mxu0 0.0
        %518 = vmatpush1.msra.mxu0 %v481
        %519 = vmatprep.subr.mxu0 0.0
        %520 = vmatpush1.msra.mxu0 %v482
        %521 = vmatprep.subr.mxu0 0.0
        %522 = vmatpush1.msra.mxu0 %v483
        %523 = vmatprep.subr.mxu0 0.0
        %524 = vmatpush1.msra.mxu0 0.0
        %525 = vmatprep.subr.mxu0 0.0
        %526 = vmatpush1.msra.mxu0 0.0
        %527 = vmatprep.subr.mxu0 0.0
        %528 = vmatpush1.msra.mxu0 0.0
        %529 = vmatprep.subr.mxu0 0.0
        %530 = vmatpush1.msra.mxu0 0.0
        %531 = vmatprep.subr.mxu0 0.0
        %532 = vmatpush1.msra.mxu0 0.0
        %533 = vmatprep.subr.mxu0 0.0
        %534 = vmatpush1.msra.mxu0 0.0
        %535 = vmatprep.subr.mxu0 0.0
        %536 = vmatpush1.msra.mxu0 0.0
        %537 = vmatprep.subr.mxu0 0.0
        %538 = vmatpush1.msra.mxu0 0.0
        %539 = vmatprep.subr.mxu0 0.0
        %540 = vmatpush1.msra.mxu0 0.0
        %541 = vmatprep.subr.mxu0 0.0
        %542 = vmatpush1.msra.mxu0 0.0
        %543 = vmatprep.subr.mxu0 0.0
        %544 = vmatpush1.msra.mxu0 0.0
        %545 = vmatprep.subr.mxu0 0.0
        %546 = vmatpush1.msra.mxu0 0.0
        %547 = vmatprep.subr.mxu0 0.0
        %548 = vmatpush1.msra.mxu0 0.0
        %549 = vmatprep.subr.mxu0 0.0
        %550 = vmatpush1.msra.mxu0 0.0
        %551 = vmatprep.subr.mxu0 0.0
        %552 = vmatpush1.msra.mxu0 0.0
        %553 = vmatprep.subr.mxu0 0.0
        %554 = vmatpush1.msra.mxu0 0.0
        %555 = vmatprep.mubr.f32.mxu0 0.0
        %556 = vmatmul.mubr.f32.gmra.mrb[0].mxu0 %v467
        %v557 = vpop.f32.mrb[0].mxu0
        %v558 = vadd.f32 %v489, %v557
        %v559 = vpop.f32.mrb[0].mxu0
        %560 = vdwg.mxu0
        %v561 = vmax.f32 %v558, 0.0
        %562 = vst [vmem:[%s433] sm:$0xff] %v561
        %v563 = vld [vmem:[#allocation3] sm:$0xff]
        %v564 = vld [vmem:[%s383] sm:$0xff]
        %v565 = vld [vmem:[%s383 + $0x8] sm:$0xff]
        %v566 = vld [vmem:[%s383 + $0x10] sm:$0xff]
        %v567 = vld [vmem:[%s383 + $0x18] sm:$0xff]
        %v568 = vld [vmem:[%s383 + $0x20] sm:$0xff]
        %v569 = vld [vmem:[%s383 + $0x28] sm:$0xff]
        %v570 = vld [vmem:[%s383 + $0x30] sm:$0xff]
        %v571 = vld [vmem:[%s383 + $0x38] sm:$0xff]
        %v572 = vld [vmem:[%s383 + $0x40] sm:$0xff]
        %v573 = vld [vmem:[%s383 + $0x48] sm:$0xff]
        %v574 = vld [vmem:[%s383 + $0x50] sm:$0xff]
        %v575 = vld [vmem:[%s383 + $0x58] sm:$0xff]
        %v576 = vld [vmem:[%s383 + $0x60] sm:$0xff]
        %v577 = vld [vmem:[%s383 + $0x68] sm:$0xff]
        %v578 = vld [vmem:[%s383 + $0x70] sm:$0xff]
        %v579 = vld [vmem:[%s383 + $0x78] sm:$0xff]
        %580 = vmatprep.subr.mxu0 0.0
        %581 = vmatpush1.msra.mxu0 %v564
        %582 = vmatprep.subr.mxu0 0.0
        %583 = vmatpush1.msra.mxu0 %v565
        %584 = vmatprep.subr.mxu0 0.0
        %585 = vmatpush1.msra.mxu0 %v566
        %586 = vmatprep.subr.mxu0 0.0
        %587 = vmatpush1.msra.mxu0 %v567
        %588 = vmatprep.subr.mxu0 0.0
        %589 = vmatpush1.msra.mxu0 %v568
        %590 = vmatprep.subr.mxu0 0.0
        %591 = vmatpush1.msra.mxu0 %v569
        %592 = vmatprep.subr.mxu0 0.0
        %593 = vmatpush1.msra.mxu0 %v570
        %594 = vmatprep.subr.mxu0 0.0
        %595 = vmatpush1.msra.mxu0 %v571
        %596 = vmatprep.subr.mxu0 0.0
        %597 = vmatpush1.msra.mxu0 %v572
        %598 = vmatprep.subr.mxu0 0.0
        %599 = vmatpush1.msra.mxu0 %v573
        %600 = vmatprep.subr.mxu0 0.0
        %601 = vmatpush1.msra.mxu0 %v574
        %602 = vmatprep.subr.mxu0 0.0
        %603 = vmatpush1.msra.mxu0 %v575
        %604 = vmatprep.subr.mxu0 0.0
        %605 = vmatpush1.msra.mxu0 %v576
        %606 = vmatprep.subr.mxu0 0.0
        %607 = vmatpush1.msra.mxu0 %v577
        %608 = vmatprep.subr.mxu0 0.0
        %609 = vmatpush1.msra.mxu0 %v578
        %610 = vmatprep.subr.mxu0 0.0
        %611 = vmatpush1.msra.mxu0 %v579
        %612 = vmatprep.subr.mxu0 0.0
        %613 = vmatpush1.msra.mxu0 0.0
        %614 = vmatprep.subr.mxu0 0.0
        %615 = vmatpush1.msra.mxu0 0.0
        %616 = vmatprep.subr.mxu0 0.0
        %617 = vmatpush1.msra.mxu0 0.0
        %618 = vmatprep.subr.mxu0 0.0
        %619 = vmatpush1.msra.mxu0 0.0
        %620 = vmatprep.subr.mxu0 0.0
        %621 = vmatpush1.msra.mxu0 0.0
        %622 = vmatprep.subr.mxu0 0.0
        %623 = vmatpush1.msra.mxu0 0.0
        %624 = vmatprep.subr.mxu0 0.0
        %625 = vmatpush1.msra.mxu0 0.0
        %626 = vmatprep.subr.mxu0 0.0
        %627 = vmatpush1.msra.mxu0 0.0
        %628 = vmatprep.subr.mxu0 0.0
        %629 = vmatpush1.msra.mxu0 0.0
        %630 = vmatprep.subr.mxu0 0.0
        %631 = vmatpush1.msra.mxu0 0.0
        %632 = vmatprep.subr.mxu0 0.0
        %633 = vmatpush1.msra.mxu0 0.0
        %634 = vmatprep.subr.mxu0 0.0
        %635 = vmatpush1.msra.mxu0 0.0
        %636 = vmatprep.subr.mxu0 0.0
        %637 = vmatpush1.msra.mxu0 0.0
        %638 = vmatprep.subr.mxu0 0.0
        %639 = vmatpush1.msra.mxu0 0.0
        %640 = vmatprep.subr.mxu0 0.0
        %641 = vmatpush1.msra.mxu0 0.0
        %642 = vmatprep.subr.mxu0 0.0
        %643 = vmatpush1.msra.mxu0 0.0
        %644 = vmatprep.mubr.f32.mxu0 0.0
        %645 = vmatmul.mubr.f32.gmra.mrb[0].mxu0 %v561
        %v646 = vpop.f32.mrb[0].mxu0
        %v647 = vadd.f32 0.0, %v646
        %v648 = vpop.f32.mrb[0].mxu0
        %649 = vdwg.mxu0
        %v650 = vadd.f32 %v563, %v647
        %651 = vst [vmem:[#allocation3] sm:$0xff] %v650
        %p652 = scmp.eq.s32.totalorder %s38, 1
        // Predicated region
        $region65: #{tpu_custom_call.1} parent=47 // pred_check
          %p653 = pneg %p652
        $region66: #{tpu_custom_call.1} parent=47 // pred_check_branch
          %655 = sbr.rel (%p653) target = $region68
        $region67: #{tpu_custom_call.1} parent=47 // pred_region
          %s656 = sld [smem:[#allocation4]]
          %v657 = vld [vmem:[#allocation3] sm:$0xff]
          %v658 = vld [vmem:[%s5] sm:$0x1]
          %v660 = vlaneseq
          %v661 = vshrl.u32 %v660, 7
          %v662 = vsub.s32 0, %v661
          %v663 = vrot.slane %v658, %v662
          %v665 = vadd.f32 %v657, %v663
          %v666 = vstv %s656
          %v667 = vmul.f32 %v665, %v666
          %v668 = vld [vmem:[%s6] sm:$0x1]
          %v670 = vlaneseq
          %v671 = vshrl.u32 %v670, 7
          %v672 = vsub.s32 0, %v671
          %v673 = vrot.slane %v668, %v672
          %v675 = vadd.f32 %v667, %v673
          %676 = vst [vmem:[%s426] sm:$0xff] %v675
        $region68: #{tpu_custom_call.1} parent=47 // pred_fallthru
          _
        %s677 = sand.u32 %s220, 1
        %s678 = scalar_lea.sflag [#allocation7], %s677
        %s679 = sand.u32 %s220, 1
        %s680 = smul.addr %s679, 8
        %s681 = scalar_lea.vmem [#allocation11], %s680
        %s682 = sand.u32 %s248, 1
        %s683 = scalar_lea.sflag [#allocation13], %s682
        %s684 = sand.u32 %s248, 1
        %s685 = smul.addr %s684, 8
        %s686 = scalar_lea.vmem [#allocation12], %s685
        // Predicated region
        $region69: #{tpu_custom_call.1} parent=47 // pred_check
          %p687 = pneg %p230
        $region70: #{tpu_custom_call.1} parent=47 // pred_check_branch
          %689 = sbr.rel (%p687) target = $region72
        $region71: #{tpu_custom_call.1} parent=47 // pred_region
          %s691 = ssub.s32 128, 128
          %692 = vsyncadd %s678, %s691
          %s693 = smul.addr %s37, 128
          %s694 = scalar_lea.hbm %s7, %s693
          %s696 = sshll.u32 %s681, 4
          %s697 = int_to_ptr.vmem [resolvable:$true] %s696
          %699 = dma.vmem_to_hbm [thread:$0]  %s697, 128, %s694, %s678
        $region72: #{tpu_custom_call.1} parent=47 // pred_fallthru
          _
        // Predicated region
        $region73: #{tpu_custom_call.1} parent=47 // pred_check
          %p700 = pneg %p258
        $region74: #{tpu_custom_call.1} parent=47 // pred_check_branch
          %702 = sbr.rel (%p700) target = $region76
        $region75: #{tpu_custom_call.1} parent=47 // pred_region
          %s704 = ssub.s32 128, 128
          %705 = vsyncadd %s683, %s704
          %s706 = smul.addr %s37, 2
          %s707 = sadd.s32 %s38, %s706
          %s708 = smul.addr %s707, 128
          %s709 = scalar_lea.hbm %s8, %s708
          %s711 = sshll.u32 %s686, 4
          %s712 = int_to_ptr.vmem [resolvable:$true] %s711
          %714 = dma.vmem_to_hbm [thread:$0]  %s712, 128, %s709, %s683
        $region76: #{tpu_custom_call.1} parent=47 // pred_fallthru
          _
      $region48: #{tpu_custom_call.1} parent=5 // pred_fallthru
        _
      %p715 = scmp.le.s32.totalorder 2, %s28
      // Predicated region
      $region77: #{tpu_custom_call.1} parent=5 // pred_check
        %p716 = pneg %p715
      $region78: #{tpu_custom_call.1} parent=5 // pred_check_branch
        %718 = sbr.rel (%p716) target = $region80
      $region79: #{tpu_custom_call.1} parent=5 // pred_region
        %s719 = ssub.s32 %s28, 2
        // Predicated region
        $region81: #{tpu_custom_call.1} parent=79 // pred_check
          %p720 = pneg %p236
        $region82: #{tpu_custom_call.1} parent=79 // pred_check_branch
          %722 = sbr.rel (%p720) target = $region84
        $region83: #{tpu_custom_call.1} parent=79 // pred_region
          %s723 = sand.u32 %s221, 1
          %s724 = scalar_lea.sflag [#allocation7], %s723
          %s725 = sand.u32 %s221, 1
          %s726 = smul.addr %s725, 8
          %s727 = scalar_lea.vmem [#allocation11], %s726
          %728 = dma.done %s724, 128
        $region84: #{tpu_custom_call.1} parent=79 // pred_fallthru
          _
        // Predicated region
        $region85: #{tpu_custom_call.1} parent=79 // pred_check
          %p729 = pneg %p264
        $region86: #{tpu_custom_call.1} parent=79 // pred_check_branch
          %731 = sbr.rel (%p729) target = $region88
        $region87: #{tpu_custom_call.1} parent=79 // pred_region
          %s732 = sand.u32 %s249, 1
          %s733 = scalar_lea.sflag [#allocation13], %s732
          %s734 = sand.u32 %s249, 1
          %s735 = smul.addr %s734, 8
          %s736 = scalar_lea.vmem [#allocation12], %s735
          %737 = dma.done %s733, 128
        $region88: #{tpu_custom_call.1} parent=79 // pred_fallthru
          _
      $region80: #{tpu_custom_call.1} parent=5 // pred_fallthru
        _
    $region6: #{tpu_custom_call.1} parent=1 // loop_footer
      %s32 = sadd.s32 1, %s28
    $region7: #{tpu_custom_call.1} parent=1 // loop_footer_branch
      %27 = sbr.rel target = $region3
    $region8: #{tpu_custom_call.1} parent=1 // loop_exit
      _
    %738 = vsyncpa [#allocation6], 1
    %s739 = scalar_lea.sflag [#allocation6], 1
    %740 = vsyncpa %s739, 1
    %741 = vsyncpa [#allocation9], 1
    %s742 = scalar_lea.sflag [#allocation9], 1
    %743 = vsyncpa %s742, 1
    %744 = vsyncpa [#allocation7], 1
    %s745 = scalar_lea.sflag [#allocation7], 1
    %746 = vsyncpa %s745, 1
    %747 = vsyncpa [#allocation13], 1
    %s748 = scalar_lea.sflag [#allocation13], 1
    %749 = vsyncpa %s748, 1

</llo_original>
